<compile_context>
chip_gen: v7x
topology: tpu7x:2x2x1
jax: 0.10.0
libtpu: 0.0.40
codegen_flags: <defaults>
</compile_context>

<pallas_src>
import functools

import jax
import jax.numpy as jnp
from jax import lax
from jax.experimental import pallas as pl
from jax.experimental.pallas import tpu as pltpu


def lstm_fc_kernel(x_ref, *refs, layer_dim, seq_len, hidden_dim):
    """refs = [w_ih_t, w_hh_t, bias] * layer_dim + [fc_w_t, fc_b]
              + [out_ref] + [ih_scratch, hs_scratch].

    x_ref:      (T, bb, D)    time-major input block (matmul dtype, e.g. bf16)
    w_ih_t:     (D_l, 4H)     transposed weight_ih, gate order [i, f, o, g]
    w_hh_t:     (H,   4H)     transposed weight_hh, gate order [i, f, o, g]
    bias:       (1,   4H)     b_ih + b_hh (f32), gate order [i, f, o, g]
    fc_w_t:     (H, O)        transposed fc weight (matmul dtype)
    fc_b:       (1, O)        f32
    out_ref:    (bb, O)       f32 output block
    ih_scratch: (T, bb, 4H)   f32 VMEM scratch (batched ih projection)
    hs_scratch: (T, bb, H)    matmul-dtype VMEM scratch (per-step h outputs)
    """
    n_layer_refs = 3 * layer_dim
    layer_refs = refs[:n_layer_refs]
    fc_w_ref = refs[n_layer_refs]
    fc_b_ref = refs[n_layer_refs + 1]
    out_ref = refs[n_layer_refs + 2]
    ih_ref = refs[n_layer_refs + 3]
    hs_ref = refs[n_layer_refs + 4]

    T = seq_len
    H = hidden_dim
    bb = x_ref.shape[1]
    mm_dtype = x_ref.dtype

    h = jnp.zeros((bb, H), jnp.float32)
    for l in range(layer_dim):
        # Hoisted per-layer loads (stay resident across the t loop).
        w_ih_t = layer_refs[3 * l + 0][...]          # (D_l, 4H) mm dtype
        w_hh_t = layer_refs[3 * l + 1][...]          # (H,   4H) mm dtype
        bias = layer_refs[3 * l + 2][...]            # (1,   4H) f32

        # Input sequence for this layer: x for layer 0, previous layer's h
        # sequence (VMEM scratch) otherwise.
        xs = x_ref[...] if l == 0 else hs_ref[...]   # (T, bb, D_l) mm dtype
        d_l = xs.shape[-1]

        # One batched MXU matmul for ALL time steps; result parked in VMEM
        # scratch instead of being carried as a live traced value.
        ih = jnp.dot(xs.reshape(T * bb, d_l), w_ih_t,
                     preferred_element_type=jnp.float32) + bias
        ih_ref[...] = ih.reshape(T, bb, 4 * H)

        def step(t, carry):
            h_prev, c_prev = carry
            gates = ih_ref[t] + jnp.dot(h_prev.astype(mm_dtype), w_hh_t,
                                        preferred_element_type=jnp.float32)
            # Gate order [i, f, o, g]: one wide sigmoid + one tanh per step.
            sig = jax.nn.sigmoid(gates[:, :3 * H])
            i_g = sig[:, 0 * H:1 * H]
            f_g = sig[:, 1 * H:2 * H]
            o_g = sig[:, 2 * H:3 * H]
            g_g = jnp.tanh(gates[:, 3 * H:])
            c_new = f_g * c_prev + i_g * g_g
            h_new = o_g * jnp.tanh(c_new)
            hs_ref[t] = h_new.astype(hs_ref.dtype)   # feeds the next layer
            return (h_new, c_new)

        h, _ = lax.fori_loop(
            0, T, step,
            (jnp.zeros((bb, H), jnp.float32), jnp.zeros((bb, H), jnp.float32)))

    # fc1 applied to the last layer's hidden state at the last time step.
    out = (jnp.dot(h.astype(mm_dtype), fc_w_ref[...],
                   preferred_element_type=jnp.float32) + fc_b_ref[...])
    out_ref[...] = out.astype(out_ref.dtype)


def lstm_forward(x, layer_params, fc_w, fc_b, *,
                 matmul_dtype=jnp.bfloat16, batch_block=None,
                 vmem_limit_bytes=64 * 1024 * 1024):
    """x: (B, T, D) batch-first.  layer_params: list of
    (w_ih, w_hh, b_ih, b_hh) in PyTorch shapes (4H, D_l), (4H, H), (4H,), (4H,).
    fc_w: (O, H); fc_b: (O,).  Returns (B, O) float32."""
    B, T, D = x.shape
    layer_dim = len(layer_params)
    H = layer_params[0][1].shape[1]
    O = fc_w.shape[0]

    # Batch grid (parallel axis -> megacore sharding on v7x).  Keep blocks
    # sublane-aligned (multiple of 8) so reshapes stay free.
    if batch_block is None:
        batch_block = 8 if (B % 8 == 0) else B
    assert B % batch_block == 0
    bb = batch_block
    grid = (B // bb,)

    def regroup(w):
        # PyTorch gate order along dim 0 is [i, f, g, o]; regroup to [i, f, o, g]
        # so the three sigmoid gates are lane-contiguous in the kernel.
        hh = w.shape[0] // 4
        return jnp.concatenate(
            [w[:hh], w[hh:2 * hh], w[3 * hh:], w[2 * hh:3 * hh]], axis=0)

    # Time-major input, pre-cast to the matmul dtype (halves the input DMA).
    args = [jnp.transpose(x, (1, 0, 2)).astype(matmul_dtype)]
    in_specs = [pl.BlockSpec((T, bb, D), lambda b: (0, b, 0))]

    for (w_ih, w_hh, b_ih, b_hh) in layer_params:
        w_ih_t = regroup(w_ih).T.astype(matmul_dtype)            # (D_l, 4H)
        w_hh_t = regroup(w_hh).T.astype(matmul_dtype)            # (H,   4H)
        bias = regroup(b_ih + b_hh).reshape(1, -1).astype(jnp.float32)
        args += [w_ih_t, w_hh_t, bias]
        in_specs += [
            pl.BlockSpec(w_ih_t.shape, lambda b: (0, 0)),
            pl.BlockSpec(w_hh_t.shape, lambda b: (0, 0)),
            pl.BlockSpec(bias.shape, lambda b: (0, 0)),
        ]

    fc_w_t = fc_w.T.astype(matmul_dtype)                         # (H, O)
    fc_b2 = fc_b.reshape(1, -1).astype(jnp.float32)              # (1, O)
    args += [fc_w_t, fc_b2]
    in_specs += [pl.BlockSpec(fc_w_t.shape, lambda b: (0, 0)),
                 pl.BlockSpec(fc_b2.shape, lambda b: (0, 0))]

    kernel = functools.partial(lstm_fc_kernel, layer_dim=layer_dim,
                               seq_len=T, hidden_dim=H)

    return pl.pallas_call(
        kernel,
        out_shape=jax.ShapeDtypeStruct((B, O), jnp.float32),
        grid_spec=pltpu.PrefetchScalarGridSpec(
            num_scalar_prefetch=0,
            grid=grid,
            in_specs=in_specs,
            out_specs=pl.BlockSpec((bb, O), lambda b: (b, 0)),
            scratch_shapes=[
                pltpu.VMEM((T, bb, 4 * H), jnp.float32),   # ih projection
                pltpu.VMEM((T, bb, H), matmul_dtype),      # per-step h outputs
            ]),
        compiler_params=pltpu.CompilerParams(
            dimension_semantics=("parallel",),
            vmem_limit_bytes=vmem_limit_bytes),
    )(*args)


def lstm_forward_ref(x, layer_params, fc_w, fc_b):
    """Pure-JAX f32 reference with PyTorch nn.LSTM semantics."""
    B, T, _ = x.shape
    H = fc_w.shape[1]
    out_seq = x
    for (w_ih, w_hh, b_ih, b_hh) in layer_params:
        h = jnp.zeros((B, H), jnp.float32)
        c = jnp.zeros((B, H), jnp.float32)
        hs = []
        for t in range(T):
            gates = out_seq[:, t, :] @ w_ih.T + b_ih + h @ w_hh.T + b_hh
            i_g = jax.nn.sigmoid(gates[:, 0 * H:1 * H])
            f_g = jax.nn.sigmoid(gates[:, 1 * H:2 * H])
            g_g = jnp.tanh(gates[:, 2 * H:3 * H])
            o_g = jax.nn.sigmoid(gates[:, 3 * H:4 * H])
            c = f_g * c + i_g * g_g
            h = o_g * jnp.tanh(c)
            hs.append(h)
        out_seq = jnp.stack(hs, axis=1)       # (B, T, H)
    return out_seq[:, -1, :] @ fc_w.T + fc_b


if __name__ == "__main__":
    # Small shapes consistent with the module's forward pass.
    input_dim, hidden_dim, layer_dim, output_dim = 16, 32, 2, 10
    batch, seq = 8, 8

    key = jax.random.PRNGKey(0)
    keys = iter(jax.random.split(key, 4 * layer_dim + 3))

    # PyTorch default LSTM init: U(-1/sqrt(hidden), 1/sqrt(hidden)).
    bound = 1.0 / jnp.sqrt(jnp.float32(hidden_dim))

    def uni(k, shape):
        return jax.random.uniform(k, shape, jnp.float32, -bound, bound)

    layer_params = []
    for l in range(layer_dim):
        d_in = input_dim if l == 0 else hidden_dim
        layer_params.append((
            uni(next(keys), (4 * hidden_dim, d_in)),        # weight_ih_l{l}
            uni(next(keys), (4 * hidden_dim, hidden_dim)),  # weight_hh_l{l}
            uni(next(keys), (4 * hidden_dim,)),             # bias_ih_l{l}
            uni(next(keys), (4 * hidden_dim,)),             # bias_hh_l{l}
        ))
    fc_w = uni(next(keys), (output_dim, hidden_dim))
    fc_b = uni(next(keys), (output_dim,))

    x = jax.random.normal(next(keys), (batch, seq, input_dim), jnp.float32)

    ref = lstm_forward_ref(x, layer_params, fc_w, fc_b)

    # bf16-matmul path (the recommended fast path).
    out = lstm_forward(x, layer_params, fc_w, fc_b)
    out = jax.block_until_ready(out)
    assert out.shape == (batch, output_dim)
    assert jnp.allclose(out, ref, atol=5e-2, rtol=5e-2)

    # f32-matmul path: tight validation of the kernel structure itself.
    out_f32 = lstm_forward(x, layer_params, fc_w, fc_b,
                           matmul_dtype=jnp.float32)
    out_f32 = jax.block_until_ready(out_f32)
    assert jnp.allclose(out_f32, ref, atol=2e-4, rtol=2e-4)

    print("KERNEL_OK")
</pallas_src>

<mosaic_0001>
module attributes {stable_mosaic.version = 11 : i64} {
  func.func @lstm_fc_kernel(%arg0: i32, %arg1: memref<8x8x16xbf16, #tpu.memory_space<vmem>>, %arg2: memref<16x128xbf16, #tpu.memory_space<vmem>>, %arg3: memref<32x128xbf16, #tpu.memory_space<vmem>>, %arg4: memref<1x128xf32, #tpu.memory_space<vmem>>, %arg5: memref<32x128xbf16, #tpu.memory_space<vmem>>, %arg6: memref<32x128xbf16, #tpu.memory_space<vmem>>, %arg7: memref<1x128xf32, #tpu.memory_space<vmem>>, %arg8: memref<32x10xbf16, #tpu.memory_space<vmem>>, %arg9: memref<1x10xf32, #tpu.memory_space<vmem>>, %arg10: memref<8x10xf32, #tpu.memory_space<vmem>>, %arg11: memref<8x8x128xf32, #tpu.memory_space<vmem>>, %arg12: memref<8x8x32xbf16, #tpu.memory_space<vmem>>) attributes {dimension_semantics = [#tpu.dimension_semantics<parallel>], iteration_bounds = array<i64: 1>, scalar_prefetch = 0 : i64, scratch_operands = 2 : i64, tpu.core_type = #tpu.core_type<tc>, window_params = [{transform_indices = @transform_0, window_bounds = array<i64: 8, 8, 16>}, {pipeline_mode = #tpu.pipeline_mode<synchronous>, transform_indices = @transform_1, window_bounds = array<i64: 16, 128>}, {pipeline_mode = #tpu.pipeline_mode<synchronous>, transform_indices = @transform_2, window_bounds = array<i64: 32, 128>}, {pipeline_mode = #tpu.pipeline_mode<synchronous>, transform_indices = @transform_3, window_bounds = array<i64: 1, 128>}, {pipeline_mode = #tpu.pipeline_mode<synchronous>, transform_indices = @transform_4, window_bounds = array<i64: 32, 128>}, {pipeline_mode = #tpu.pipeline_mode<synchronous>, transform_indices = @transform_5, window_bounds = array<i64: 32, 128>}, {pipeline_mode = #tpu.pipeline_mode<synchronous>, transform_indices = @transform_6, window_bounds = array<i64: 1, 128>}, {pipeline_mode = #tpu.pipeline_mode<synchronous>, transform_indices = @transform_7, window_bounds = array<i64: 32, 10>}, {pipeline_mode = #tpu.pipeline_mode<synchronous>, transform_indices = @transform_8, window_bounds = array<i64: 1, 10>}, {transform_indices = @transform_9, window_bounds = array<i64: 8, 10>}]} {
    %c0 = arith.constant 0 : index
    %c0_0 = arith.constant 0 : index
    %0 = vector.load %arg2[%c0, %c0_0] : memref<16x128xbf16, #tpu.memory_space<vmem>>, vector<16x128xbf16>
    %c0_1 = arith.constant 0 : index
    %c0_2 = arith.constant 0 : index
    %1 = vector.load %arg3[%c0_1, %c0_2] : memref<32x128xbf16, #tpu.memory_space<vmem>>, vector<32x128xbf16>
    %c0_3 = arith.constant 0 : index
    %c0_4 = arith.constant 0 : index
    %2 = vector.load %arg4[%c0_3, %c0_4] : memref<1x128xf32, #tpu.memory_space<vmem>>, vector<1x128xf32>
    %c0_5 = arith.constant 0 : index
    %c0_6 = arith.constant 0 : index
    %c0_7 = arith.constant 0 : index
    %3 = vector.load %arg1[%c0_5, %c0_6, %c0_7] : memref<8x8x16xbf16, #tpu.memory_space<vmem>>, vector<8x8x16xbf16>
    %4 = vector.shape_cast %3 : vector<8x8x16xbf16> to vector<64x16xbf16>
    %cst = arith.constant dense<0.000000e+00> : vector<64x128xf32>
    %5 = tpu.matmul %4, %0, %cst {dimension_numbers = #tpu.dot_dimension_numbers<[1], [0], [0], [1], [0, 0, 1, 1], [], []>} : vector<64x16xbf16>, vector<16x128xbf16>, vector<64x128xf32> -> vector<64x128xf32>
    %6 = vector.broadcast %2 : vector<1x128xf32> to vector<64x128xf32>
    %7 = arith.addf %5, %6 : vector<64x128xf32>
    %8 = vector.shape_cast %7 : vector<64x128xf32> to vector<8x8x128xf32>
    %c0_8 = arith.constant 0 : index
    %c0_9 = arith.constant 0 : index
    %c0_10 = arith.constant 0 : index
    %9 = vector.load %arg11[%c0_8, %c0_9, %c0_10] : memref<8x8x128xf32, #tpu.memory_space<vmem>>, vector<8x8x128xf32>
    tpu.vector_store %arg11[%c0_8, %c0_9, %c0_10], %8 {strides = array<i32>} : memref<8x8x128xf32, #tpu.memory_space<vmem>>, vector<8x8x128xf32>,
    %cst_11 = arith.constant 0.000000e+00 : f32
    %10 = vector.broadcast %cst_11 : f32 to vector<8x32xf32>
    %cst_12 = arith.constant 0.000000e+00 : f32
    %11 = vector.broadcast %cst_12 : f32 to vector<8x32xf32>
    %c0_i32 = arith.constant 0 : i32
    %c8_i32 = arith.constant 8 : i32
    %12 = arith.addi %c0_i32, %c8_i32 : i32
    %c1_i32 = arith.constant 1 : i32
    %13:2 = scf.for %arg13 = %c0_i32 to %12 step %c1_i32 iter_args(%arg14 = %10, %arg15 = %11) -> (vector<8x32xf32>, vector<8x32xf32>)  : i32 {
      %35 = arith.index_cast %arg13 : i32 to index
      %c0_40 = arith.constant 0 : index
      %c0_41 = arith.constant 0 : index
      %36 = vector.load %arg11[%35, %c0_40, %c0_41] : memref<8x8x128xf32, #tpu.memory_space<vmem>>, vector<1x8x128xf32>
      %37 = vector.shape_cast %36 : vector<1x8x128xf32> to vector<8x128xf32>
      %38 = arith.truncf %arg14 : vector<8x32xf32> to vector<8x32xbf16>
      %cst_42 = arith.constant dense<0.000000e+00> : vector<8x128xf32>
      %39 = tpu.matmul %38, %1, %cst_42 {dimension_numbers = #tpu.dot_dimension_numbers<[1], [0], [0], [1], [0, 0, 1, 1], [], []>} : vector<8x32xbf16>, vector<32x128xbf16>, vector<8x128xf32> -> vector<8x128xf32>
      %40 = arith.addf %37, %39 : vector<8x128xf32>
      %41 = vector.extract_strided_slice %40 {offsets = [0, 0], sizes = [8, 96], strides = [1, 1]} : vector<8x128xf32> to vector<8x96xf32>
      %42 = arith.negf %41 : vector<8x96xf32>
      %43 = math.exp %42 : vector<8x96xf32>
      %cst_43 = arith.constant 1.000000e+00 : f32
      %44 = vector.broadcast %cst_43 : f32 to vector<8x96xf32>
      %45 = arith.addf %44, %43 : vector<8x96xf32>
      %46 = arith.divf %44, %45 : vector<8x96xf32>
      %47 = vector.extract_strided_slice %46 {offsets = [0, 0], sizes = [8, 32], strides = [1, 1]} : vector<8x96xf32> to vector<8x32xf32>
      %48 = vector.extract_strided_slice %46 {offsets = [0, 32], sizes = [8, 32], strides = [1, 1]} : vector<8x96xf32> to vector<8x32xf32>
      %49 = vector.extract_strided_slice %46 {offsets = [0, 64], sizes = [8, 32], strides = [1, 1]} : vector<8x96xf32> to vector<8x32xf32>
      %50 = vector.extract_strided_slice %40 {offsets = [0, 96], sizes = [8, 32], strides = [1, 1]} : vector<8x128xf32> to vector<8x32xf32>
      %51 = math.tanh %50 : vector<8x32xf32>
      %52 = arith.mulf %48, %arg15 : vector<8x32xf32>
      %53 = arith.mulf %47, %51 : vector<8x32xf32>
      %54 = arith.addf %52, %53 : vector<8x32xf32>
      %55 = math.tanh %54 : vector<8x32xf32>
      %56 = arith.mulf %49, %55 : vector<8x32xf32>
      %57 = arith.truncf %56 : vector<8x32xf32> to vector<8x32xbf16>
      %58 = arith.index_cast %arg13 : i32 to index
      %c0_44 = arith.constant 0 : index
      %c0_45 = arith.constant 0 : index
      %59 = vector.load %arg12[%58, %c0_44, %c0_45] : memref<8x8x32xbf16, #tpu.memory_space<vmem>>, vector<1x8x32xbf16>
      %60 = vector.shape_cast %59 : vector<1x8x32xbf16> to vector<8x32xbf16>
      %61 = vector.shape_cast %57 : vector<8x32xbf16> to vector<1x8x32xbf16>
      tpu.vector_store %arg12[%58, %c0_44, %c0_45], %61 {strides = array<i32>} : memref<8x8x32xbf16, #tpu.memory_space<vmem>>, vector<1x8x32xbf16>,
      scf.yield %56, %54 : vector<8x32xf32>, vector<8x32xf32>
    }
    %c8_i32_13 = arith.constant 8 : i32
    %c0_14 = arith.constant 0 : index
    %c0_15 = arith.constant 0 : index
    %14 = vector.load %arg5[%c0_14, %c0_15] : memref<32x128xbf16, #tpu.memory_space<vmem>>, vector<32x128xbf16>
    %c0_16 = arith.constant 0 : index
    %c0_17 = arith.constant 0 : index
    %15 = vector.load %arg6[%c0_16, %c0_17] : memref<32x128xbf16, #tpu.memory_space<vmem>>, vector<32x128xbf16>
    %c0_18 = arith.constant 0 : index
    %c0_19 = arith.constant 0 : index
    %16 = vector.load %arg7[%c0_18, %c0_19] : memref<1x128xf32, #tpu.memory_space<vmem>>, vector<1x128xf32>
    %c0_20 = arith.constant 0 : index
    %c0_21 = arith.constant 0 : index
    %c0_22 = arith.constant 0 : index
    %17 = vector.load %arg12[%c0_20, %c0_21, %c0_22] : memref<8x8x32xbf16, #tpu.memory_space<vmem>>, vector<8x8x32xbf16>
    %18 = vector.shape_cast %17 : vector<8x8x32xbf16> to vector<64x32xbf16>
    %cst_23 = arith.constant dense<0.000000e+00> : vector<64x128xf32>
    %19 = tpu.matmul %18, %14, %cst_23 {dimension_numbers = #tpu.dot_dimension_numbers<[1], [0], [0], [1], [0, 0, 1, 1], [], []>} : vector<64x32xbf16>, vector<32x128xbf16>, vector<64x128xf32> -> vector<64x128xf32>
    %20 = vector.broadcast %16 : vector<1x128xf32> to vector<64x128xf32>
    %21 = arith.addf %19, %20 : vector<64x128xf32>
    %22 = vector.shape_cast %21 : vector<64x128xf32> to vector<8x8x128xf32>
    %c0_24 = arith.constant 0 : index
    %c0_25 = arith.constant 0 : index
    %c0_26 = arith.constant 0 : index
    %23 = vector.load %arg11[%c0_24, %c0_25, %c0_26] : memref<8x8x128xf32, #tpu.memory_space<vmem>>, vector<8x8x128xf32>
    tpu.vector_store %arg11[%c0_24, %c0_25, %c0_26], %22 {strides = array<i32>} : memref<8x8x128xf32, #tpu.memory_space<vmem>>, vector<8x8x128xf32>,
    %cst_27 = arith.constant 0.000000e+00 : f32
    %24 = vector.broadcast %cst_27 : f32 to vector<8x32xf32>
    %cst_28 = arith.constant 0.000000e+00 : f32
    %25 = vector.broadcast %cst_28 : f32 to vector<8x32xf32>
    %c0_i32_29 = arith.constant 0 : i32
    %c8_i32_30 = arith.constant 8 : i32
    %26 = arith.addi %c0_i32_29, %c8_i32_30 : i32
    %c1_i32_31 = arith.constant 1 : i32
    %27:2 = scf.for %arg13 = %c0_i32_29 to %26 step %c1_i32_31 iter_args(%arg14 = %24, %arg15 = %25) -> (vector<8x32xf32>, vector<8x32xf32>)  : i32 {
      %35 = arith.index_cast %arg13 : i32 to index
      %c0_40 = arith.constant 0 : index
      %c0_41 = arith.constant 0 : index
      %36 = vector.load %arg11[%35, %c0_40, %c0_41] : memref<8x8x128xf32, #tpu.memory_space<vmem>>, vector<1x8x128xf32>
      %37 = vector.shape_cast %36 : vector<1x8x128xf32> to vector<8x128xf32>
      %38 = arith.truncf %arg14 : vector<8x32xf32> to vector<8x32xbf16>
      %cst_42 = arith.constant dense<0.000000e+00> : vector<8x128xf32>
      %39 = tpu.matmul %38, %15, %cst_42 {dimension_numbers = #tpu.dot_dimension_numbers<[1], [0], [0], [1], [0, 0, 1, 1], [], []>} : vector<8x32xbf16>, vector<32x128xbf16>, vector<8x128xf32> -> vector<8x128xf32>
      %40 = arith.addf %37, %39 : vector<8x128xf32>
      %41 = vector.extract_strided_slice %40 {offsets = [0, 0], sizes = [8, 96], strides = [1, 1]} : vector<8x128xf32> to vector<8x96xf32>
      %42 = arith.negf %41 : vector<8x96xf32>
      %43 = math.exp %42 : vector<8x96xf32>
      %cst_43 = arith.constant 1.000000e+00 : f32
      %44 = vector.broadcast %cst_43 : f32 to vector<8x96xf32>
      %45 = arith.addf %44, %43 : vector<8x96xf32>
      %46 = arith.divf %44, %45 : vector<8x96xf32>
      %47 = vector.extract_strided_slice %46 {offsets = [0, 0], sizes = [8, 32], strides = [1, 1]} : vector<8x96xf32> to vector<8x32xf32>
      %48 = vector.extract_strided_slice %46 {offsets = [0, 32], sizes = [8, 32], strides = [1, 1]} : vector<8x96xf32> to vector<8x32xf32>
      %49 = vector.extract_strided_slice %46 {offsets = [0, 64], sizes = [8, 32], strides = [1, 1]} : vector<8x96xf32> to vector<8x32xf32>
      %50 = vector.extract_strided_slice %40 {offsets = [0, 96], sizes = [8, 32], strides = [1, 1]} : vector<8x128xf32> to vector<8x32xf32>
      %51 = math.tanh %50 : vector<8x32xf32>
      %52 = arith.mulf %48, %arg15 : vector<8x32xf32>
      %53 = arith.mulf %47, %51 : vector<8x32xf32>
      %54 = arith.addf %52, %53 : vector<8x32xf32>
      %55 = math.tanh %54 : vector<8x32xf32>
      %56 = arith.mulf %49, %55 : vector<8x32xf32>
      %57 = arith.truncf %56 : vector<8x32xf32> to vector<8x32xbf16>
      %58 = arith.index_cast %arg13 : i32 to index
      %c0_44 = arith.constant 0 : index
      %c0_45 = arith.constant 0 : index
      %59 = vector.load %arg12[%58, %c0_44, %c0_45] : memref<8x8x32xbf16, #tpu.memory_space<vmem>>, vector<1x8x32xbf16>
      %60 = vector.shape_cast %59 : vector<1x8x32xbf16> to vector<8x32xbf16>
      %61 = vector.shape_cast %57 : vector<8x32xbf16> to vector<1x8x32xbf16>
      tpu.vector_store %arg12[%58, %c0_44, %c0_45], %61 {strides = array<i32>} : memref<8x8x32xbf16, #tpu.memory_space<vmem>>, vector<1x8x32xbf16>,
      scf.yield %56, %54 : vector<8x32xf32>, vector<8x32xf32>
    }
    %c8_i32_32 = arith.constant 8 : i32
    %28 = arith.truncf %27#0 : vector<8x32xf32> to vector<8x32xbf16>
    %c0_33 = arith.constant 0 : index
    %c0_34 = arith.constant 0 : index
    %29 = vector.load %arg8[%c0_33, %c0_34] : memref<32x10xbf16, #tpu.memory_space<vmem>>, vector<32x10xbf16>
    %cst_35 = arith.constant dense<0.000000e+00> : vector<8x10xf32>
    %30 = tpu.matmul %28, %29, %cst_35 {dimension_numbers = #tpu.dot_dimension_numbers<[1], [0], [0], [1], [0, 0, 1, 1], [], []>} : vector<8x32xbf16>, vector<32x10xbf16>, vector<8x10xf32> -> vector<8x10xf32>
    %c0_36 = arith.constant 0 : index
    %c0_37 = arith.constant 0 : index
    %31 = vector.load %arg9[%c0_36, %c0_37] : memref<1x10xf32, #tpu.memory_space<vmem>>, vector<1x10xf32>
    %32 = vector.broadcast %31 : vector<1x10xf32> to vector<8x10xf32>
    %33 = arith.addf %30, %32 : vector<8x10xf32>
    %c0_38 = arith.constant 0 : index
    %c0_39 = arith.constant 0 : index
    %34 = vector.load %arg10[%c0_38, %c0_39] : memref<8x10xf32, #tpu.memory_space<vmem>>, vector<8x10xf32>
    tpu.vector_store %arg10[%c0_38, %c0_39], %33 {strides = array<i32>} : memref<8x10xf32, #tpu.memory_space<vmem>>, vector<8x10xf32>,
    return
  }
  func.func @transform_0(%arg0: i32) -> (i32, i32, i32) {
    %c0_i32 = arith.constant 0 : i32
    %c0_i32_0 = arith.constant 0 : i32
    %c0_i32_1 = arith.constant 0 : i32
    return %c0_i32, %arg0, %c0_i32_0 : i32, i32, i32
  }
  func.func @transform_1(%arg0: i32) -> (i32, i32) {
    %c0_i32 = arith.constant 0 : i32
    %c0_i32_0 = arith.constant 0 : i32
    %c0_i32_1 = arith.constant 0 : i32
    return %c0_i32, %c0_i32_0 : i32, i32
  }
  func.func @transform_2(%arg0: i32) -> (i32, i32) {
    %c0_i32 = arith.constant 0 : i32
    %c0_i32_0 = arith.constant 0 : i32
    %c0_i32_1 = arith.constant 0 : i32
    return %c0_i32, %c0_i32_0 : i32, i32
  }
  func.func @transform_3(%arg0: i32) -> (i32, i32) {
    %c0_i32 = arith.constant 0 : i32
    %c0_i32_0 = arith.constant 0 : i32
    %c0_i32_1 = arith.constant 0 : i32
    return %c0_i32, %c0_i32_0 : i32, i32
  }
  func.func @transform_4(%arg0: i32) -> (i32, i32) {
    %c0_i32 = arith.constant 0 : i32
    %c0_i32_0 = arith.constant 0 : i32
    %c0_i32_1 = arith.constant 0 : i32
    return %c0_i32, %c0_i32_0 : i32, i32
  }
  func.func @transform_5(%arg0: i32) -> (i32, i32) {
    %c0_i32 = arith.constant 0 : i32
    %c0_i32_0 = arith.constant 0 : i32
    %c0_i32_1 = arith.constant 0 : i32
    return %c0_i32, %c0_i32_0 : i32, i32
  }
  func.func @transform_6(%arg0: i32) -> (i32, i32) {
    %c0_i32 = arith.constant 0 : i32
    %c0_i32_0 = arith.constant 0 : i32
    %c0_i32_1 = arith.constant 0 : i32
    return %c0_i32, %c0_i32_0 : i32, i32
  }
  func.func @transform_7(%arg0: i32) -> (i32, i32) {
    %c0_i32 = arith.constant 0 : i32
    %c0_i32_0 = arith.constant 0 : i32
    %c0_i32_1 = arith.constant 0 : i32
    return %c0_i32, %c0_i32_0 : i32, i32
  }
  func.func @transform_8(%arg0: i32) -> (i32, i32) {
    %c0_i32 = arith.constant 0 : i32
    %c0_i32_0 = arith.constant 0 : i32
    %c0_i32_1 = arith.constant 0 : i32
    return %c0_i32, %c0_i32_0 : i32, i32
  }
  func.func @transform_9(%arg0: i32) -> (i32, i32) {
    %c0_i32 = arith.constant 0 : i32
    %c0_i32_0 = arith.constant 0 : i32
    return %arg0, %c0_i32 : i32, i32
  }
}

</mosaic_0001>

<llo_original>
// kernel: tpu_custom_call.1
$region0: #{tpu_custom_call.1}
  #allocation0 [shape = 'u32[]', space=smem, size = 0x4, offset = 0x4, fixed_abs, tag = 'smem constant byte address 0x4 - core index']
  #allocation1 [shape = 'u32[144,128]{1,0:T(1,128)}', space=vmem, size = 0x12000, scoped, tag = 'internal scratch']
  #allocation2 [shape = 'f32[8,8,128]{2,1,0:T(8,128)}', space=vmem, size = 0x8000, scoped, tag = 'scratch operand']
  #allocation3 [shape = 'bf16[8,8,32]{2,1,0:T(8,128)(2,1)}', space=vmem, size = 0x4000, scoped, tag = 'scratch operand']
  %s0 = inlined_call_operand.hbm [shape: bf16[8,8,16], index: 0, kind: input, shape index: {}]
  %s1 = inlined_call_operand.hbm [shape: bf16[16,128], index: 1, kind: input, shape index: {}]
  %s2 = inlined_call_operand.hbm [shape: bf16[32,128], index: 2, kind: input, shape index: {}]
  %s3 = inlined_call_operand.hbm [shape: f32[1,128], index: 3, kind: input, shape index: {}]
  %s4 = inlined_call_operand.hbm [shape: bf16[32,128], index: 4, kind: input, shape index: {}]
  %s5 = inlined_call_operand.hbm [shape: bf16[32,128], index: 5, kind: input, shape index: {}]
  %s6 = inlined_call_operand.hbm [shape: f32[1,128], index: 6, kind: input, shape index: {}]
  %s7 = inlined_call_operand.hbm [shape: bf16[32,10], index: 7, kind: input, shape index: {}]
  %s8 = inlined_call_operand.hbm [shape: f32[1,10], index: 8, kind: input, shape index: {}]
  %s9 = inlined_call_operand.hbm [shape: f32[8,10], index: 9, kind: output, shape index: {}]
  %s10 = sld [smem:[#allocation0]]
  $region96: #{tpu_custom_call.1} parent=0
    _
  %s12 = ssub.s32 1, %s10
  %s13 = scalar_select 0, %s12, %s10
  $region1: #{tpu_custom_call.1} parent=0
    #allocation4 [shape = 'u8[16384]{0}', space=vmem, size = 0x4000, scoped, tag = 'input window, operand 0, single buffered']
    #allocation5 [shape = 's32[1]{0}', space=sflag, size = 0x4, scoped, tag = 'scoped memory for tpu_custom_call.1']
    #allocation6 [shape = 's32[1]{0}', space=sflag, size = 0x4, scoped, tag = 'scoped memory for tpu_custom_call.1']
    #allocation7 [shape = 'u8[4096]{0}', space=vmem, size = 0x1000, scoped, tag = 'input window, operand 1, single buffered']
    #allocation8 [shape = 's32[1]{0}', space=sflag, size = 0x4, scoped, tag = 'scoped memory for tpu_custom_call.1']
    #allocation9 [shape = 'u8[8192]{0}', space=vmem, size = 0x2000, scoped, tag = 'input window, operand 2, single buffered']
    #allocation10 [shape = 'u8[512]{0}', space=vmem, size = 0x400, scoped, tag = 'input window, operand 3, single buffered']
    #allocation11 [shape = 's32[1]{0}', space=sflag, size = 0x4, scoped, tag = 'scoped memory for tpu_custom_call.1']
    #allocation12 [shape = 'u8[8192]{0}', space=vmem, size = 0x2000, scoped, tag = 'input window, operand 4, single buffered']
    #allocation13 [shape = 'u8[8192]{0}', space=vmem, size = 0x2000, scoped, tag = 'input window, operand 5, single buffered']
    #allocation14 [shape = 's32[1]{0}', space=sflag, size = 0x4, scoped, tag = 'scoped memory for tpu_custom_call.1']
    #allocation15 [shape = 'u8[512]{0}', space=vmem, size = 0x400, scoped, tag = 'input window, operand 6, single buffered']
    #allocation16 [shape = 'u8[8192]{0}', space=vmem, size = 0x2000, scoped, tag = 'input window, operand 7, single buffered']
    #allocation17 [shape = 's32[1]{0}', space=sflag, size = 0x4, scoped, tag = 'scoped memory for tpu_custom_call.1']
    #allocation18 [shape = 'u8[512]{0}', space=vmem, size = 0x400, scoped, tag = 'input window, operand 8, single buffered']
    #allocation19 [shape = 'u8[4096]{0}', space=vmem, size = 0x1000, scoped, tag = 'output window, operand 0, single buffered']
    %14 = vsyncpa [#allocation5], 0
    %15 = vsyncpa [#allocation8], 0
    %16 = vsyncpa [#allocation11], 0
    %17 = vsyncpa [#allocation14], 0
    %18 = vsyncpa [#allocation17], 0
    %19 = vsyncpa [#allocation6], 0
    // Predicated region
    $region2: #{tpu_custom_call.1} parent=1 // pred_check
      _
    $region3: #{tpu_custom_call.1} parent=1 // pred_check_branch
      %21 = sbr.rel (0) target = $region5
    $region4: #{tpu_custom_call.1} parent=1 // pred_region
      %s23 = ssub.s32 512, 512
      %24 = vsyncadd [#allocation5], %s23
      %s25 = sshll.u32 [#allocation4], 4
      %s26 = int_to_ptr.vmem [resolvable:$true] %s25
      %31 = dma.hbm_to_vmem [thread:$0]  %s0, 512, %s26, [#allocation5], 64, 64, 4
    $region5: #{tpu_custom_call.1} parent=1 // pred_fallthru
      _
    // Predicated region
    $region6: #{tpu_custom_call.1} parent=1 // pred_check
      _
    $region7: #{tpu_custom_call.1} parent=1 // pred_check_branch
      %33 = sbr.rel (0) target = $region9
    $region8: #{tpu_custom_call.1} parent=1 // pred_region
      %s35 = ssub.s32 128, 128
      %36 = vsyncadd [#allocation8], %s35
      %s37 = sshll.u32 [#allocation7], 4
      %s38 = int_to_ptr.vmem [resolvable:$true] %s37
      %43 = dma.hbm_to_vmem [thread:$0]  %s1, 128, %s38, [#allocation8], 64, 64, 4
    $region9: #{tpu_custom_call.1} parent=1 // pred_fallthru
      _
    // Predicated region
    $region10: #{tpu_custom_call.1} parent=1 // pred_check
      _
    $region11: #{tpu_custom_call.1} parent=1 // pred_check_branch
      %45 = sbr.rel (0) target = $region13
    $region12: #{tpu_custom_call.1} parent=1 // pred_region
      %s47 = ssub.s32 256, 256
      %48 = vsyncadd [#allocation8], %s47
      %s49 = sshll.u32 [#allocation9], 4
      %s50 = int_to_ptr.vmem [resolvable:$true] %s49
      %55 = dma.hbm_to_vmem [thread:$0]  %s2, 256, %s50, [#allocation8], 64, 64, 4
    $region13: #{tpu_custom_call.1} parent=1 // pred_fallthru
      _
    // Predicated region
    $region14: #{tpu_custom_call.1} parent=1 // pred_check
      _
    $region15: #{tpu_custom_call.1} parent=1 // pred_check_branch
      %57 = sbr.rel (0) target = $region17
    $region16: #{tpu_custom_call.1} parent=1 // pred_region
      %s59 = ssub.s32 16, 16
      %60 = vsyncadd [#allocation11], %s59
      %s62 = sshll.u32 [#allocation10], 4
      %s63 = int_to_ptr.vmem [resolvable:$true] %s62
      %65 = dma.hbm_to_vmem [thread:$0]  %s3, 16, %s63, [#allocation11]
    $region17: #{tpu_custom_call.1} parent=1 // pred_fallthru
      _
    // Predicated region
    $region18: #{tpu_custom_call.1} parent=1 // pred_check
      _
    $region19: #{tpu_custom_call.1} parent=1 // pred_check_branch
      %67 = sbr.rel (0) target = $region21
    $region20: #{tpu_custom_call.1} parent=1 // pred_region
      %s69 = ssub.s32 256, 256
      %70 = vsyncadd [#allocation11], %s69
      %s71 = sshll.u32 [#allocation12], 4
      %s72 = int_to_ptr.vmem [resolvable:$true] %s71
      %77 = dma.hbm_to_vmem [thread:$0]  %s4, 256, %s72, [#allocation11], 64, 64, 4
    $region21: #{tpu_custom_call.1} parent=1 // pred_fallthru
      _
    // Predicated region
    $region22: #{tpu_custom_call.1} parent=1 // pred_check
      _
    $region23: #{tpu_custom_call.1} parent=1 // pred_check_branch
      %79 = sbr.rel (0) target = $region25
    $region24: #{tpu_custom_call.1} parent=1 // pred_region
      %s81 = ssub.s32 256, 256
      %82 = vsyncadd [#allocation14], %s81
      %s83 = sshll.u32 [#allocation13], 4
      %s84 = int_to_ptr.vmem [resolvable:$true] %s83
      %89 = dma.hbm_to_vmem [thread:$0]  %s5, 256, %s84, [#allocation14], 64, 64, 4
    $region25: #{tpu_custom_call.1} parent=1 // pred_fallthru
      _
    // Predicated region
    $region26: #{tpu_custom_call.1} parent=1 // pred_check
      _
    $region27: #{tpu_custom_call.1} parent=1 // pred_check_branch
      %91 = sbr.rel (0) target = $region29
    $region28: #{tpu_custom_call.1} parent=1 // pred_region
      %s93 = ssub.s32 16, 16
      %94 = vsyncadd [#allocation14], %s93
      %s96 = sshll.u32 [#allocation15], 4
      %s97 = int_to_ptr.vmem [resolvable:$true] %s96
      %99 = dma.hbm_to_vmem [thread:$0]  %s6, 16, %s97, [#allocation14]
    $region29: #{tpu_custom_call.1} parent=1 // pred_fallthru
      _
    // Predicated region
    $region30: #{tpu_custom_call.1} parent=1 // pred_check
      _
    $region31: #{tpu_custom_call.1} parent=1 // pred_check_branch
      %101 = sbr.rel (0) target = $region33
    $region32: #{tpu_custom_call.1} parent=1 // pred_region
      %s103 = ssub.s32 256, 256
      %104 = vsyncadd [#allocation17], %s103
      %s105 = sshll.u32 [#allocation16], 4
      %s106 = int_to_ptr.vmem [resolvable:$true] %s105
      %111 = dma.hbm_to_vmem [thread:$0]  %s7, 256, %s106, [#allocation17], 64, 64, 4
    $region33: #{tpu_custom_call.1} parent=1 // pred_fallthru
      _
    // Predicated region
    $region34: #{tpu_custom_call.1} parent=1 // pred_check
      _
    $region35: #{tpu_custom_call.1} parent=1 // pred_check_branch
      %113 = sbr.rel (0) target = $region37
    $region36: #{tpu_custom_call.1} parent=1 // pred_region
      %s115 = ssub.s32 16, 16
      %116 = vsyncadd [#allocation17], %s115
      %s118 = sshll.u32 [#allocation18], 4
      %s119 = int_to_ptr.vmem [resolvable:$true] %s118
      %121 = dma.hbm_to_vmem [thread:$0]  %s8, 16, %s119, [#allocation17]
    $region37: #{tpu_custom_call.1} parent=1 // pred_fallthru
      _
    // Predicated region
    $region38: #{tpu_custom_call.1} parent=1 // pred_check
      _
    $region39: #{tpu_custom_call.1} parent=1 // pred_check_branch
      %123 = sbr.rel (0) target = $region41
    $region40: #{tpu_custom_call.1} parent=1 // pred_region
      %124 = dma.done [#allocation5], 512
    $region41: #{tpu_custom_call.1} parent=1 // pred_fallthru
      _
    // Predicated region
    $region42: #{tpu_custom_call.1} parent=1 // pred_check
      _
    $region43: #{tpu_custom_call.1} parent=1 // pred_check_branch
      %126 = sbr.rel (0) target = $region45
    $region44: #{tpu_custom_call.1} parent=1 // pred_region
      %127 = dma.done [#allocation8], 128
    $region45: #{tpu_custom_call.1} parent=1 // pred_fallthru
      _
    // Predicated region
    $region46: #{tpu_custom_call.1} parent=1 // pred_check
      _
    $region47: #{tpu_custom_call.1} parent=1 // pred_check_branch
      %129 = sbr.rel (0) target = $region49
    $region48: #{tpu_custom_call.1} parent=1 // pred_region
      %130 = dma.done [#allocation8], 256
    $region49: #{tpu_custom_call.1} parent=1 // pred_fallthru
      _
    // Predicated region
    $region50: #{tpu_custom_call.1} parent=1 // pred_check
      _
    $region51: #{tpu_custom_call.1} parent=1 // pred_check_branch
      %132 = sbr.rel (0) target = $region53
    $region52: #{tpu_custom_call.1} parent=1 // pred_region
      %133 = dma.done [#allocation11], 16
    $region53: #{tpu_custom_call.1} parent=1 // pred_fallthru
      _
    // Predicated region
    $region54: #{tpu_custom_call.1} parent=1 // pred_check
      _
    $region55: #{tpu_custom_call.1} parent=1 // pred_check_branch
      %135 = sbr.rel (0) target = $region57
    $region56: #{tpu_custom_call.1} parent=1 // pred_region
      %136 = dma.done [#allocation11], 256
    $region57: #{tpu_custom_call.1} parent=1 // pred_fallthru
      _
    // Predicated region
    $region58: #{tpu_custom_call.1} parent=1 // pred_check
      _
    $region59: #{tpu_custom_call.1} parent=1 // pred_check_branch
      %138 = sbr.rel (0) target = $region61
    $region60: #{tpu_custom_call.1} parent=1 // pred_region
      %139 = dma.done [#allocation14], 256
    $region61: #{tpu_custom_call.1} parent=1 // pred_fallthru
      _
    // Predicated region
    $region62: #{tpu_custom_call.1} parent=1 // pred_check
      _
    $region63: #{tpu_custom_call.1} parent=1 // pred_check_branch
      %141 = sbr.rel (0) target = $region65
    $region64: #{tpu_custom_call.1} parent=1 // pred_region
      %142 = dma.done [#allocation14], 16
    $region65: #{tpu_custom_call.1} parent=1 // pred_fallthru
      _
    // Predicated region
    $region66: #{tpu_custom_call.1} parent=1 // pred_check
      _
    $region67: #{tpu_custom_call.1} parent=1 // pred_check_branch
      %144 = sbr.rel (0) target = $region69
    $region68: #{tpu_custom_call.1} parent=1 // pred_region
      %145 = dma.done [#allocation17], 256
    $region69: #{tpu_custom_call.1} parent=1 // pred_fallthru
      _
    // Predicated region
    $region70: #{tpu_custom_call.1} parent=1 // pred_check
      _
    $region71: #{tpu_custom_call.1} parent=1 // pred_check_branch
      %147 = sbr.rel (0) target = $region73
    $region72: #{tpu_custom_call.1} parent=1 // pred_region
      %148 = dma.done [#allocation17], 16
    $region73: #{tpu_custom_call.1} parent=1 // pred_fallthru
      _
    %v150 = vld [vmem:[#allocation7] sm:$0xf]
    %v151 = vld [vmem:[#allocation7 + $0x4] sm:$0xf]
    %v152 = vld [vmem:[#allocation9] sm:$0xf]
    %v153 = vld [vmem:[#allocation9 + $0x4] sm:$0xf]
    %v154 = vld [vmem:[#allocation9 + $0x8] sm:$0xf]
    %v155 = vld [vmem:[#allocation9 + $0xc] sm:$0xf]
    %v156 = vld [vmem:[#allocation10] sm:$0x1]
    %v157 = vld [vmem:[#allocation4] sm:$0xf]
    %v158 = vld [vmem:[#allocation4 + $0x4] sm:$0xf]
    %v159 = vld [vmem:[#allocation4 + $0x8] sm:$0xf]
    %v160 = vld [vmem:[#allocation4 + $0xc] sm:$0xf]
    %v161 = vld [vmem:[#allocation4 + $0x10] sm:$0xf]
    %v162 = vld [vmem:[#allocation4 + $0x14] sm:$0xf]
    %v163 = vld [vmem:[#allocation4 + $0x18] sm:$0xf]
    %v164 = vld [vmem:[#allocation4 + $0x1c] sm:$0xf]
    %v166 = vlaneseq
    %v167 = vshrl.u32 %v166, 7
    %v168 = vsub.s32 0, %v167
    %v169 = vrot.slane %v156, %v168
    %v179 = vunpack.c.l.b16 %v157
    %v180 = vunpack.c.l.b16 %v158
    %v181 = vunpack.c.l.b16 %v159
    %v182 = vunpack.c.l.b16 %v160
    %v183 = vunpack.c.l.b16 %v161
    %v184 = vunpack.c.l.b16 %v162
    %v185 = vunpack.c.l.b16 %v163
    %v186 = vunpack.c.l.b16 %v164
    %v187 = vpack.c.b16 %v180, %v179
    %v188 = vpack.c.b16 %v182, %v181
    %v189 = vpack.c.b16 %v184, %v183
    %v190 = vpack.c.b16 %v186, %v185
    %v193 = vunpack.c.l.b16 %v150
    %v194 = vunpack.c.l.b16 %v151
    %v195 = vpack.c.b16 %v194, %v193
    %vm197 = vcmask 130048
    %v199 = vsel %vm197, %v187, 0
    %v202 = vsel %vm197, %v188, 0
    %v205 = vsel %vm197, %v189, 0
    %v208 = vsel %vm197, %v190, 0
    %210 = vmatprep.subr.bf16.mxu0 0
    %211 = vmatpush1.bf16.msra.mxu0 %v195
    %212 = vmatprep.subr.bf16.mxu0 0
    %213 = vmatpush1.bf16.msra.mxu0 0
    %214 = vmatprep.subr.bf16.mxu0 0
    %215 = vmatpush1.bf16.msra.mxu0 0
    %216 = vmatprep.subr.bf16.mxu0 0
    %217 = vmatpush1.bf16.msra.mxu0 0
    %218 = vmatprep.subr.bf16.mxu0 0
    %219 = vmatpush1.bf16.msra.mxu0 0
    %220 = vmatprep.subr.bf16.mxu0 0
    %221 = vmatpush1.bf16.msra.mxu0 0
    %222 = vmatprep.subr.bf16.mxu0 0
    %223 = vmatpush1.bf16.msra.mxu0 0
    %224 = vmatprep.subr.bf16.mxu0 0
    %225 = vmatpush1.bf16.msra.mxu0 0
    %226 = vmatprep.subr.bf16.mxu0 0
    %227 = vmatpush1.bf16.msra.mxu0 0
    %228 = vmatprep.subr.bf16.mxu0 0
    %229 = vmatpush1.bf16.msra.mxu0 0
    %230 = vmatprep.subr.bf16.mxu0 0
    %231 = vmatpush1.bf16.msra.mxu0 0
    %232 = vmatprep.subr.bf16.mxu0 0
    %233 = vmatpush1.bf16.msra.mxu0 0
    %234 = vmatprep.subr.bf16.mxu0 0
    %235 = vmatpush1.bf16.msra.mxu0 0
    %236 = vmatprep.subr.bf16.mxu0 0
    %237 = vmatpush1.bf16.msra.mxu0 0
    %238 = vmatprep.subr.bf16.mxu0 0
    %239 = vmatpush1.bf16.msra.mxu0 0
    %240 = vmatprep.subr.bf16.mxu0 0
    %241 = vmatpush1.bf16.msra.mxu0 0
    %242 = vmatprep.mubr.bf16.mxu0 0
    %243 = vmatmul.mubr.bf16.gmra.mrb[0].mxu0 %v199
    %v244 = vpop.f32.mrb[0].mxu0
    %v245 = vadd.f32 %v169, %v244
    %v246 = vpop.f32.mrb[0].mxu0
    %v247 = vpop.f32.mrb[0].mxu0
    %v248 = vadd.f32 %v169, %v247
    %v249 = vpop.f32.mrb[0].mxu0
    %250 = vmatprep.mubr.bf16.mxu0 0
    %251 = vmatmul.mubr.bf16.gmra.mrb[0].mxu0 %v202
    %v252 = vpop.f32.mrb[0].mxu0
    %v253 = vadd.f32 %v169, %v252
    %v254 = vpop.f32.mrb[0].mxu0
    %v255 = vpop.f32.mrb[0].mxu0
    %v256 = vadd.f32 %v169, %v255
    %v257 = vpop.f32.mrb[0].mxu0
    %258 = vmatprep.mubr.bf16.mxu0 0
    %259 = vmatmul.mubr.bf16.gmra.mrb[0].mxu0 %v205
    %v260 = vpop.f32.mrb[0].mxu0
    %v261 = vadd.f32 %v169, %v260
    %v262 = vpop.f32.mrb[0].mxu0
    %v263 = vpop.f32.mrb[0].mxu0
    %v264 = vadd.f32 %v169, %v263
    %v265 = vpop.f32.mrb[0].mxu0
    %266 = vmatprep.mubr.bf16.mxu0 0
    %267 = vmatmul.mubr.bf16.gmra.mrb[0].mxu0 %v208
    %v268 = vpop.f32.mrb[0].mxu0
    %v269 = vadd.f32 %v169, %v268
    %v270 = vpop.f32.mrb[0].mxu0
    %v271 = vpop.f32.mrb[0].mxu0
    %v272 = vadd.f32 %v169, %v271
    %v273 = vpop.f32.mrb[0].mxu0
    %274 = vdwg.mxu0
    %275 = vst [vmem:[#allocation2] sm:$0xff] %v245
    %276 = vst [vmem:[#allocation2 + $0x8] sm:$0xff] %v248
    %277 = vst [vmem:[#allocation2 + $0x10] sm:$0xff] %v253
    %278 = vst [vmem:[#allocation2 + $0x18] sm:$0xff] %v256
    %279 = vst [vmem:[#allocation2 + $0x20] sm:$0xff] %v261
    %280 = vst [vmem:[#allocation2 + $0x28] sm:$0xff] %v264
    %281 = vst [vmem:[#allocation2 + $0x30] sm:$0xff] %v269
    %282 = vst [vmem:[#allocation2 + $0x38] sm:$0xff] %v272
    loop: start=0, step=1, limit=8
    $region74: #{tpu_custom_call.1} parent=1 // loop_pre_header
      _
    $region75: #{tpu_custom_call.1} parent=1 // loop_header
      %s284 = sphi 0, %s288
      %p285 = scmp.ge.s32.totalorder %s284, 8
      %v289 = vphi 0.0, %v378
      %v290 = vphi 0.0, %v372
    $region76: #{tpu_custom_call.1} parent=1 // loop_header_branch
      %287 = sbr.rel (%p285) target = $region80
    $region77: #{tpu_custom_call.1} parent=1 // loop_body
      %s291 = smul.u32 %s284, 8
      %s292 = scalar_lea.vmem [#allocation2], %s291
      %v293 = vld [vmem:[%s292] sm:$0xff]
      %v294 = vpack.c.bf16 %v289, %v289
      %296 = vrot.lane.b32.xlu0 %v294, 64
      %v297 = vpop.permute.xlu0 %296
      %v302 = vunpack.c.l.b16 %v152
      %v303 = vunpack.c.l.b16 %v153
      %v304 = vunpack.c.l.b16 %v154
      %v305 = vunpack.c.l.b16 %v155
      %v306 = vpack.c.b16 %v303, %v302
      %v307 = vpack.c.b16 %v305, %v304
      %vm310 = vcmask 261120
      %v312 = vsel %vm310, %v297, 0
      %314 = vmatprep.subr.bf16.mxu0 0
      %315 = vmatpush1.bf16.msra.mxu0 %v306
      %316 = vmatprep.subr.bf16.mxu0 0
      %317 = vmatpush1.bf16.msra.mxu0 %v307
      %318 = vmatprep.subr.bf16.mxu0 0
      %319 = vmatpush1.bf16.msra.mxu0 0
      %320 = vmatprep.subr.bf16.mxu0 0
      %321 = vmatpush1.bf16.msra.mxu0 0
      %322 = vmatprep.subr.bf16.mxu0 0
      %323 = vmatpush1.bf16.msra.mxu0 0
      %324 = vmatprep.subr.bf16.mxu0 0
      %325 = vmatpush1.bf16.msra.mxu0 0
      %326 = vmatprep.subr.bf16.mxu0 0
      %327 = vmatpush1.bf16.msra.mxu0 0
      %328 = vmatprep.subr.bf16.mxu0 0
      %329 = vmatpush1.bf16.msra.mxu0 0
      %330 = vmatprep.subr.bf16.mxu0 0
      %331 = vmatpush1.bf16.msra.mxu0 0
      %332 = vmatprep.subr.bf16.mxu0 0
      %333 = vmatpush1.bf16.msra.mxu0 0
      %334 = vmatprep.subr.bf16.mxu0 0
      %335 = vmatpush1.bf16.msra.mxu0 0
      %336 = vmatprep.subr.bf16.mxu0 0
      %337 = vmatpush1.bf16.msra.mxu0 0
      %338 = vmatprep.subr.bf16.mxu0 0
      %339 = vmatpush1.bf16.msra.mxu0 0
      %340 = vmatprep.subr.bf16.mxu0 0
      %341 = vmatpush1.bf16.msra.mxu0 0
      %342 = vmatprep.subr.bf16.mxu0 0
      %343 = vmatpush1.bf16.msra.mxu0 0
      %344 = vmatprep.subr.bf16.mxu0 0
      %345 = vmatpush1.bf16.msra.mxu0 0
      %346 = vmatprep.mubr.bf16.mxu0 0
      %347 = vmatmul.mubr.bf16.gmra.mrb[0].mxu0 %v312
      %v348 = vpop.f32.mrb[0].mxu0
      %v349 = vadd.f32 0.0, %v348
      %v350 = vpop.f32.mrb[0].mxu0
      %v351 = vpop.f32.mrb[0].mxu0
      %v352 = vpop.f32.mrb[0].mxu0
      %353 = vdwg.mxu0
      %v354 = vadd.f32 %v293, %v349
      %v355 = vxor.u32 %v354, 2147483648
      %v356 = vmul.f32 %v355, 1.442695
      %v357 = vpow.pop %v356
      %v358 = vadd.f32 %v357, 1.0
      %v359 = vrcp.pop %v358
      %v360 = vmul.f32 1.0, %v359
      %v361 = vtanh.pop %v354
      %v362 = vmul.f32 %v360, %v290
      %364 = vrot.lane.b32.xlu0 %v361, 32
      %v365 = vpop.permute.xlu0 %364
      %v367 = vmul.f32 %v360, %v365
      %369 = vrot.lane.b32.xlu0 %v367, 32
      %v370 = vpop.permute.xlu0 %369
      %v372 = vadd.f32 %v362, %v370
      %v373 = vtanh.pop %v372
      %375 = vrot.lane.b32.xlu0 %v373, 32
      %v376 = vpop.permute.xlu0 %375
      %v378 = vmul.f32 %v360, %v376
      %v379 = vpack.c.bf16 %v378, %v378
      %v381 = vunpack.c.l.b16 %v379
      %v382 = vpack.c.b16 %v381, %v381
      %383 = vrot.lane.b32.xlu0 %v382, 64
      %v384 = vpop.permute.xlu0 %383
      %s386 = smul.addr %s284, 4
      %s387 = scalar_lea.vmem [#allocation3], %s386
      %vm388 = vcmask 257024
      %389 = vst.msk [vmem:[%s387] sm:$0xf] %vm388, %v384
    $region78: #{tpu_custom_call.1} parent=1 // loop_footer
      %s288 = sadd.s32 1, %s284
    $region79: #{tpu_custom_call.1} parent=1 // loop_footer_branch
      %283 = sbr.rel target = $region75
    $region80: #{tpu_custom_call.1} parent=1 // loop_exit
      _
    %v390 = vld [vmem:[#allocation12] sm:$0xf]
    %v391 = vld [vmem:[#allocation12 + $0x4] sm:$0xf]
    %v392 = vld [vmem:[#allocation12 + $0x8] sm:$0xf]
    %v393 = vld [vmem:[#allocation12 + $0xc] sm:$0xf]
    %v394 = vld [vmem:[#allocation13] sm:$0xf]
    %v395 = vld [vmem:[#allocation13 + $0x4] sm:$0xf]
    %v396 = vld [vmem:[#allocation13 + $0x8] sm:$0xf]
    %v397 = vld [vmem:[#allocation13 + $0xc] sm:$0xf]
    %v398 = vld [vmem:[#allocation15] sm:$0x1]
    %v399 = vld [vmem:[#allocation3] sm:$0xf]
    %v400 = vld [vmem:[#allocation3 + $0x4] sm:$0xf]
    %v401 = vld [vmem:[#allocation3 + $0x8] sm:$0xf]
    %v402 = vld [vmem:[#allocation3 + $0xc] sm:$0xf]
    %v403 = vld [vmem:[#allocation3 + $0x10] sm:$0xf]
    %v404 = vld [vmem:[#allocation3 + $0x14] sm:$0xf]
    %v405 = vld [vmem:[#allocation3 + $0x18] sm:$0xf]
    %v406 = vld [vmem:[#allocation3 + $0x1c] sm:$0xf]
    %v408 = vlaneseq
    %v409 = vshrl.u32 %v408, 7
    %v410 = vsub.s32 0, %v409
    %v411 = vrot.slane %v398, %v410
    %v421 = vunpack.c.l.b16 %v399
    %v422 = vunpack.c.l.b16 %v400
    %v423 = vunpack.c.l.b16 %v401
    %v424 = vunpack.c.l.b16 %v402
    %v425 = vunpack.c.l.b16 %v403
    %v426 = vunpack.c.l.b16 %v404
    %v427 = vunpack.c.l.b16 %v405
    %v428 = vunpack.c.l.b16 %v406
    %v429 = vpack.c.b16 %v422, %v421
    %v430 = vpack.c.b16 %v424, %v423
    %v431 = vpack.c.b16 %v426, %v425
    %v432 = vpack.c.b16 %v428, %v427
    %v437 = vunpack.c.l.b16 %v390
    %v438 = vunpack.c.l.b16 %v391
    %v439 = vunpack.c.l.b16 %v392
    %v440 = vunpack.c.l.b16 %v393
    %v441 = vpack.c.b16 %v438, %v437
    %v442 = vpack.c.b16 %v440, %v439
    %vm445 = vcmask 261120
    %v447 = vsel %vm445, %v429, 0
    %v450 = vsel %vm445, %v430, 0
    %v453 = vsel %vm445, %v431, 0
    %v456 = vsel %vm445, %v432, 0
    %458 = vmatprep.subr.bf16.mxu0 0
    %459 = vmatpush1.bf16.msra.mxu0 %v441
    %460 = vmatprep.subr.bf16.mxu0 0
    %461 = vmatpush1.bf16.msra.mxu0 %v442
    %462 = vmatprep.subr.bf16.mxu0 0
    %463 = vmatpush1.bf16.msra.mxu0 0
    %464 = vmatprep.subr.bf16.mxu0 0
    %465 = vmatpush1.bf16.msra.mxu0 0
    %466 = vmatprep.subr.bf16.mxu0 0
    %467 = vmatpush1.bf16.msra.mxu0 0
    %468 = vmatprep.subr.bf16.mxu0 0
    %469 = vmatpush1.bf16.msra.mxu0 0
    %470 = vmatprep.subr.bf16.mxu0 0
    %471 = vmatpush1.bf16.msra.mxu0 0
    %472 = vmatprep.subr.bf16.mxu0 0
    %473 = vmatpush1.bf16.msra.mxu0 0
    %474 = vmatprep.subr.bf16.mxu0 0
    %475 = vmatpush1.bf16.msra.mxu0 0
    %476 = vmatprep.subr.bf16.mxu0 0
    %477 = vmatpush1.bf16.msra.mxu0 0
    %478 = vmatprep.subr.bf16.mxu0 0
    %479 = vmatpush1.bf16.msra.mxu0 0
    %480 = vmatprep.subr.bf16.mxu0 0
    %481 = vmatpush1.bf16.msra.mxu0 0
    %482 = vmatprep.subr.bf16.mxu0 0
    %483 = vmatpush1.bf16.msra.mxu0 0
    %484 = vmatprep.subr.bf16.mxu0 0
    %485 = vmatpush1.bf16.msra.mxu0 0
    %486 = vmatprep.subr.bf16.mxu0 0
    %487 = vmatpush1.bf16.msra.mxu0 0
    %488 = vmatprep.subr.bf16.mxu0 0
    %489 = vmatpush1.bf16.msra.mxu0 0
    %490 = vmatprep.mubr.bf16.mxu0 0
    %491 = vmatmul.mubr.bf16.gmra.mrb[0].mxu0 %v447
    %v492 = vpop.f32.mrb[0].mxu0
    %v493 = vadd.f32 %v411, %v492
    %v494 = vpop.f32.mrb[0].mxu0
    %v495 = vpop.f32.mrb[0].mxu0
    %v496 = vadd.f32 %v411, %v495
    %v497 = vpop.f32.mrb[0].mxu0
    %498 = vmatprep.mubr.bf16.mxu0 0
    %499 = vmatmul.mubr.bf16.gmra.mrb[0].mxu0 %v450
    %v500 = vpop.f32.mrb[0].mxu0
    %v501 = vadd.f32 %v411, %v500
    %v502 = vpop.f32.mrb[0].mxu0
    %v503 = vpop.f32.mrb[0].mxu0
    %v504 = vadd.f32 %v411, %v503
    %v505 = vpop.f32.mrb[0].mxu0
    %506 = vmatprep.mubr.bf16.mxu0 0
    %507 = vmatmul.mubr.bf16.gmra.mrb[0].mxu0 %v453
    %v508 = vpop.f32.mrb[0].mxu0
    %v509 = vadd.f32 %v411, %v508
    %v510 = vpop.f32.mrb[0].mxu0
    %v511 = vpop.f32.mrb[0].mxu0
    %v512 = vadd.f32 %v411, %v511
    %v513 = vpop.f32.mrb[0].mxu0
    %514 = vmatprep.mubr.bf16.mxu0 0
    %515 = vmatmul.mubr.bf16.gmra.mrb[0].mxu0 %v456
    %v516 = vpop.f32.mrb[0].mxu0
    %v517 = vadd.f32 %v411, %v516
    %v518 = vpop.f32.mrb[0].mxu0
    %v519 = vpop.f32.mrb[0].mxu0
    %v520 = vadd.f32 %v411, %v519
    %v521 = vpop.f32.mrb[0].mxu0
    %522 = vdwg.mxu0
    %523 = vst [vmem:[#allocation2] sm:$0xff] %v493
    %524 = vst [vmem:[#allocation2 + $0x8] sm:$0xff] %v496
    %525 = vst [vmem:[#allocation2 + $0x10] sm:$0xff] %v501
    %526 = vst [vmem:[#allocation2 + $0x18] sm:$0xff] %v504
    %527 = vst [vmem:[#allocation2 + $0x20] sm:$0xff] %v509
    %528 = vst [vmem:[#allocation2 + $0x28] sm:$0xff] %v512
    %529 = vst [vmem:[#allocation2 + $0x30] sm:$0xff] %v517
    %530 = vst [vmem:[#allocation2 + $0x38] sm:$0xff] %v520
    loop: start=0, step=1, limit=8
    $region81: #{tpu_custom_call.1} parent=1 // loop_pre_header
      _
    $region82: #{tpu_custom_call.1} parent=1 // loop_header
      %s532 = sphi 0, %s536
      %p533 = scmp.ge.s32.totalorder %s532, 8
      %v537 = vphi 0.0, %v625
      %v538 = vphi 0.0, %v619
    $region83: #{tpu_custom_call.1} parent=1 // loop_header_branch
      %535 = sbr.rel (%p533) target = $region87
    $region84: #{tpu_custom_call.1} parent=1 // loop_body
      %s539 = smul.u32 %s532, 8
      %s540 = scalar_lea.vmem [#allocation2], %s539
      %v541 = vld [vmem:[%s540] sm:$0xff]
      %v542 = vpack.c.bf16 %v537, %v537
      %544 = vrot.lane.b32.xlu0 %v542, 64
      %v545 = vpop.permute.xlu0 %544
      %v550 = vunpack.c.l.b16 %v394
      %v551 = vunpack.c.l.b16 %v395
      %v552 = vunpack.c.l.b16 %v396
      %v553 = vunpack.c.l.b16 %v397
      %v554 = vpack.c.b16 %v551, %v550
      %v555 = vpack.c.b16 %v553, %v552
      %v559 = vsel %vm445, %v545, 0
      %561 = vmatprep.subr.bf16.mxu0 0
      %562 = vmatpush1.bf16.msra.mxu0 %v554
      %563 = vmatprep.subr.bf16.mxu0 0
      %564 = vmatpush1.bf16.msra.mxu0 %v555
      %565 = vmatprep.subr.bf16.mxu0 0
      %566 = vmatpush1.bf16.msra.mxu0 0
      %567 = vmatprep.subr.bf16.mxu0 0
      %568 = vmatpush1.bf16.msra.mxu0 0
      %569 = vmatprep.subr.bf16.mxu0 0
      %570 = vmatpush1.bf16.msra.mxu0 0
      %571 = vmatprep.subr.bf16.mxu0 0
      %572 = vmatpush1.bf16.msra.mxu0 0
      %573 = vmatprep.subr.bf16.mxu0 0
      %574 = vmatpush1.bf16.msra.mxu0 0
      %575 = vmatprep.subr.bf16.mxu0 0
      %576 = vmatpush1.bf16.msra.mxu0 0
      %577 = vmatprep.subr.bf16.mxu0 0
      %578 = vmatpush1.bf16.msra.mxu0 0
      %579 = vmatprep.subr.bf16.mxu0 0
      %580 = vmatpush1.bf16.msra.mxu0 0
      %581 = vmatprep.subr.bf16.mxu0 0
      %582 = vmatpush1.bf16.msra.mxu0 0
      %583 = vmatprep.subr.bf16.mxu0 0
      %584 = vmatpush1.bf16.msra.mxu0 0
      %585 = vmatprep.subr.bf16.mxu0 0
      %586 = vmatpush1.bf16.msra.mxu0 0
      %587 = vmatprep.subr.bf16.mxu0 0
      %588 = vmatpush1.bf16.msra.mxu0 0
      %589 = vmatprep.subr.bf16.mxu0 0
      %590 = vmatpush1.bf16.msra.mxu0 0
      %591 = vmatprep.subr.bf16.mxu0 0
      %592 = vmatpush1.bf16.msra.mxu0 0
      %593 = vmatprep.mubr.bf16.mxu0 0
      %594 = vmatmul.mubr.bf16.gmra.mrb[0].mxu0 %v559
      %v595 = vpop.f32.mrb[0].mxu0
      %v596 = vadd.f32 0.0, %v595
      %v597 = vpop.f32.mrb[0].mxu0
      %v598 = vpop.f32.mrb[0].mxu0
      %v599 = vpop.f32.mrb[0].mxu0
      %600 = vdwg.mxu0
      %v601 = vadd.f32 %v541, %v596
      %v602 = vxor.u32 %v601, 2147483648
      %v603 = vmul.f32 %v602, 1.442695
      %v604 = vpow.pop %v603
      %v605 = vadd.f32 %v604, 1.0
      %v606 = vrcp.pop %v605
      %v607 = vmul.f32 1.0, %v606
      %v608 = vtanh.pop %v601
      %v609 = vmul.f32 %v607, %v538
      %611 = vrot.lane.b32.xlu0 %v608, 32
      %v612 = vpop.permute.xlu0 %611
      %v614 = vmul.f32 %v607, %v612
      %616 = vrot.lane.b32.xlu0 %v614, 32
      %v617 = vpop.permute.xlu0 %616
      %v619 = vadd.f32 %v609, %v617
      %v620 = vtanh.pop %v619
      %622 = vrot.lane.b32.xlu0 %v620, 32
      %v623 = vpop.permute.xlu0 %622
      %v625 = vmul.f32 %v607, %v623
      %v626 = vpack.c.bf16 %v625, %v625
      %v628 = vunpack.c.l.b16 %v626
      %v629 = vpack.c.b16 %v628, %v628
      %630 = vrot.lane.b32.xlu0 %v629, 64
      %v631 = vpop.permute.xlu0 %630
      %s633 = smul.addr %s532, 4
      %s634 = scalar_lea.vmem [#allocation3], %s633
      %vm635 = vcmask 257024
      %636 = vst.msk [vmem:[%s634] sm:$0xf] %vm635, %v631
    $region85: #{tpu_custom_call.1} parent=1 // loop_footer
      %s536 = sadd.s32 1, %s532
    $region86: #{tpu_custom_call.1} parent=1 // loop_footer_branch
      %531 = sbr.rel target = $region82
    $region87: #{tpu_custom_call.1} parent=1 // loop_exit
      _
    %v637 = vpack.c.bf16 %v537, %v537
    %v638 = vld [vmem:[#allocation16] sm:$0xf]
    %v639 = vld [vmem:[#allocation16 + $0x4] sm:$0xf]
    %v640 = vld [vmem:[#allocation16 + $0x8] sm:$0xf]
    %v641 = vld [vmem:[#allocation16 + $0xc] sm:$0xf]
    %v642 = vld [vmem:[#allocation18] sm:$0x1]
    %v644 = vlaneseq
    %v645 = vshrl.u32 %v644, 7
    %v646 = vsub.s32 0, %v645
    %v647 = vrot.slane %v642, %v646
    %650 = vrot.lane.b32.xlu0 %v637, 64
    %v651 = vpop.permute.xlu0 %650
    %v656 = vunpack.c.l.b16 %v638
    %v657 = vunpack.c.l.b16 %v639
    %v658 = vunpack.c.l.b16 %v640
    %v659 = vunpack.c.l.b16 %v641
    %v660 = vpack.c.b16 %v657, %v656
    %v661 = vpack.c.b16 %v659, %v658
    %v665 = vsel %vm445, %v651, 0
    %667 = vmatprep.subr.bf16.mxu0 0
    %668 = vmatpush1.bf16.msra.mxu0 %v660
    %669 = vmatprep.subr.bf16.mxu0 0
    %670 = vmatpush1.bf16.msra.mxu0 %v661
    %671 = vmatprep.subr.bf16.mxu0 0
    %672 = vmatpush1.bf16.msra.mxu0 0
    %673 = vmatprep.subr.bf16.mxu0 0
    %674 = vmatpush1.bf16.msra.mxu0 0
    %675 = vmatprep.subr.bf16.mxu0 0
    %676 = vmatpush1.bf16.msra.mxu0 0
    %677 = vmatprep.subr.bf16.mxu0 0
    %678 = vmatpush1.bf16.msra.mxu0 0
    %679 = vmatprep.subr.bf16.mxu0 0
    %680 = vmatpush1.bf16.msra.mxu0 0
    %681 = vmatprep.subr.bf16.mxu0 0
    %682 = vmatpush1.bf16.msra.mxu0 0
    %683 = vmatprep.subr.bf16.mxu0 0
    %684 = vmatpush1.bf16.msra.mxu0 0
    %685 = vmatprep.subr.bf16.mxu0 0
    %686 = vmatpush1.bf16.msra.mxu0 0
    %687 = vmatprep.subr.bf16.mxu0 0
    %688 = vmatpush1.bf16.msra.mxu0 0
    %689 = vmatprep.subr.bf16.mxu0 0
    %690 = vmatpush1.bf16.msra.mxu0 0
    %691 = vmatprep.subr.bf16.mxu0 0
    %692 = vmatpush1.bf16.msra.mxu0 0
    %693 = vmatprep.subr.bf16.mxu0 0
    %694 = vmatpush1.bf16.msra.mxu0 0
    %695 = vmatprep.subr.bf16.mxu0 0
    %696 = vmatpush1.bf16.msra.mxu0 0
    %697 = vmatprep.subr.bf16.mxu0 0
    %698 = vmatpush1.bf16.msra.mxu0 0
    %699 = vmatprep.mubr.bf16.mxu0 0
    %700 = vmatmul.mubr.bf16.gmra.mrb[0].mxu0 %v665
    %v701 = vpop.f32.mrb[0].mxu0
    %v702 = vadd.f32 %v647, %v701
    %v703 = vpop.f32.mrb[0].mxu0
    %v704 = vpop.f32.mrb[0].mxu0
    %v705 = vpop.f32.mrb[0].mxu0
    %706 = vdwg.mxu0
    %vm707 = vcmask 80896
    %708 = vst.msk [vmem:[#allocation19] sm:$0xff] %vm707, %v702
    // Predicated region
    $region88: #{tpu_custom_call.1} parent=1 // pred_check
      _
    $region89: #{tpu_custom_call.1} parent=1 // pred_check_branch
      %710 = sbr.rel (0) target = $region91
    $region90: #{tpu_custom_call.1} parent=1 // pred_region
      %s712 = ssub.s32 128, 128
      %713 = vsyncadd [#allocation6], %s712
      %s715 = sshll.u32 [#allocation19], 4
      %s716 = int_to_ptr.vmem [resolvable:$true] %s715
      %718 = dma.vmem_to_hbm [thread:$0]  %s716, 128, %s9, [#allocation6]
    $region91: #{tpu_custom_call.1} parent=1 // pred_fallthru
      _
    // Predicated region
    $region92: #{tpu_custom_call.1} parent=1 // pred_check
      _
    $region93: #{tpu_custom_call.1} parent=1 // pred_check_branch
      %720 = sbr.rel (0) target = $region95
    $region94: #{tpu_custom_call.1} parent=1 // pred_region
      %721 = dma.done [#allocation6], 128
    $region95: #{tpu_custom_call.1} parent=1 // pred_fallthru
      _
    %722 = vsyncpa [#allocation5], 1
    %723 = vsyncpa [#allocation8], 1
    %724 = vsyncpa [#allocation11], 1
    %725 = vsyncpa [#allocation14], 1
    %726 = vsyncpa [#allocation17], 1
    %727 = vsyncpa [#allocation6], 1

</llo_original>
